<compile_context>
chip_gen: v7x
topology: tpu7x:2x2x1
jax: 0.10.0
libtpu: 0.0.40
codegen_flags: <defaults>
</compile_context>

<pallas_src>
import jax
import jax.numpy as jnp
from jax.experimental import pallas as pl
from jax.experimental.pallas import tpu as pltpu

HIDDEN = 256


def _generator_kernel(x_ref, w1_ref, b1_ref, w2_ref, b2_ref, out_ref):
    # Cast x to bf16 in-kernel (VPU pack in an otherwise idle slot).
    x = x_ref[...].astype(jnp.bfloat16)
    # Linear 1 on the MXU: (TB, z) bf16 @ (z, 256) bf16 -> f32 accumulators.
    h = jnp.dot(x, w1_ref[...], preferred_element_type=jnp.float32)
    h = h + b1_ref[...]                    # bias in f32 (VPU)
    h = jnp.maximum(h, 0.1 * h)            # LeakyReLU(0.1): single vmax
    # Linear 2 on the MXU: (TB, 256) bf16 @ (256, img_dim) bf16 -> f32.
    o = jnp.dot(h.astype(jnp.bfloat16), w2_ref[...],
                preferred_element_type=jnp.float32)
    o = o + b2_ref[...]
    # bf16 tanh (EUP bf16 path on v6e/v7x); store is bf16 -> half the HBM
    # write traffic of f32 on a write-bound kernel.
    out_ref[...] = jnp.tanh(o.astype(jnp.bfloat16)).astype(out_ref.dtype)


def _round_up(n, m):
    return ((n + m - 1) // m) * m


def _choose_batch_tile(B):
    """Pick (tile_rows, padded_rows).

    Tiles are multiples of 8, at most 1024 rows; once the batch is non-tiny
    we require >= 2 tiles (so v7x megacore sharding has work) and minimize
    padded (garbage) rows, which are pure wasted HBM write bandwidth.
    """
    b8 = _round_up(B, 8)
    if b8 <= 128:
        return b8, b8                      # single small tile
    n_min = max(2, -(-b8 // 1024))         # >= 2 tiles; tiles <= 1024 rows
    best = None                            # (waste, n_tiles, tile)
    for n in range(n_min, n_min + 32):
        tb = _round_up(-(-b8 // n), 8)
        if tb > 1024:
            continue
        waste = n * tb - b8
        if best is None or (waste, n) < (best[0], best[1]):
            best = (waste, n, tb)
    _, n, tb = best
    return tb, n * tb


@jax.jit
def generator_forward(x, w1, b1, w2, b2):
    """x: (B, z_dim) f32.  w1: (z_dim, 256), b1: (256,),
    w2: (256, img_dim), b2: (img_dim,).  Returns (B, img_dim) bf16."""
    B, z = x.shape
    hidden = w1.shape[1]
    img_dim = w2.shape[1]

    tb, b_pad = _choose_batch_tile(B)

    # Pad the batch only when needed (no copy in the common aligned case).
    x_p = x if b_pad == B else jnp.pad(x, ((0, b_pad - B), (0, 0)))

    # bf16 weights (tiny casts); biases stay f32, added post-accumulation.
    w1_b = w1.astype(jnp.bfloat16)
    b1_2d = b1.reshape(1, hidden).astype(jnp.float32)
    w2_b = w2.astype(jnp.bfloat16)
    b2_2d = b2.reshape(1, img_dim).astype(jnp.float32)

    grid = (b_pad // tb,)

    out = pl.pallas_call(
        _generator_kernel,
        out_shape=jax.ShapeDtypeStruct((b_pad, img_dim), jnp.bfloat16),
        grid_spec=pltpu.PrefetchScalarGridSpec(
            num_scalar_prefetch=0,
            grid=grid,
            in_specs=[
                # x: tiled along the batch axis (f32, cast in-kernel).
                pl.BlockSpec((tb, z), lambda i: (i, 0)),
                # Weights/biases: constant index_map -> DMA'd once, resident
                # in VMEM across all batch tiles.
                pl.BlockSpec((z, hidden), lambda i: (0, 0)),
                pl.BlockSpec((1, hidden), lambda i: (0, 0)),
                pl.BlockSpec((hidden, img_dim), lambda i: (0, 0)),
                pl.BlockSpec((1, img_dim), lambda i: (0, 0)),
            ],
            # Unpadded feature dim: last block dim == full array dim (784).
            out_specs=pl.BlockSpec((tb, img_dim), lambda i: (i, 0)),
        ),
        compiler_params=pltpu.CompilerParams(
            # Independent batch tiles -> shard across v7x's 2 TensorCores
            # (no-op on single-TC v5e/v6e).
            dimension_semantics=("parallel",),
            vmem_limit_bytes=16 * 1024 * 1024,
        ),
    )(x_p, w1_b, b1_2d, w2_b, b2_2d)

    # Strip batch padding only if we added any (feature dim is unpadded).
    return out if b_pad == B else out[:B]


def init_generator_params(key, z_dim, img_dim, hidden=HIDDEN):
    """Deterministic init mimicking nn.Linear's Kaiming-uniform defaults."""
    k1, k2, k3, k4 = jax.random.split(key, 4)
    bound1 = 1.0 / jnp.sqrt(z_dim)
    bound2 = 1.0 / jnp.sqrt(hidden)
    # Stored already transposed: (in, out).
    w1 = jax.random.uniform(k1, (z_dim, hidden), jnp.float32, -bound1, bound1)
    b1 = jax.random.uniform(k2, (hidden,), jnp.float32, -bound1, bound1)
    w2 = jax.random.uniform(k3, (hidden, img_dim), jnp.float32, -bound2, bound2)
    b2 = jax.random.uniform(k4, (img_dim,), jnp.float32, -bound2, bound2)
    return w1, b1, w2, b2


if __name__ == "__main__":
    z_dim = 64
    img_dim = 784   # 28*28 MNIST image, as in the reference GAN
    batch = 8

    key = jax.random.PRNGKey(0)
    k_params, k_x, k_x2 = jax.random.split(key, 3)
    w1, b1, w2, b2 = init_generator_params(k_params, z_dim, img_dim)

    def ref_fwd(xx):
        h = xx @ w1 + b1
        h = jnp.where(h >= 0, h, 0.1 * h)
        return jnp.tanh(h @ w2 + b2)

    # Small-batch check (single tile).
    x = jax.random.normal(k_x, (batch, z_dim), jnp.float32)
    out = jax.block_until_ready(generator_forward(x, w1, b1, w2, b2))
    ref = ref_fwd(x)
    assert out.shape == (batch, img_dim)
    # bf16 weights/activations/output -> looser tolerance vs. f32 reference.
    err = jnp.max(jnp.abs(out.astype(jnp.float32) - ref))
    assert jnp.allclose(out.astype(jnp.float32), ref, atol=3e-2, rtol=3e-2), float(err)

    # Batch not divisible by 8 -> exercises the padding-aware tile chooser
    # (B=300 -> tb=152, 2 tiles, only 4 padded rows) and the "parallel" grid.
    batch2 = 300
    x2 = jax.random.normal(k_x2, (batch2, z_dim), jnp.float32)
    out2 = jax.block_until_ready(generator_forward(x2, w1, b1, w2, b2))
    ref2 = ref_fwd(x2)
    assert out2.shape == (batch2, img_dim)
    err2 = jnp.max(jnp.abs(out2.astype(jnp.float32) - ref2))
    assert jnp.allclose(out2.astype(jnp.float32), ref2, atol=3e-2, rtol=3e-2), float(err2)

    print("KERNEL_OK")
</pallas_src>

<mosaic_0001>
module attributes {stable_mosaic.version = 11 : i64} {
  func.func @_generator_kernel(%arg0: i32, %arg1: memref<8x64xf32, #tpu.memory_space<vmem>>, %arg2: memref<64x256xbf16, #tpu.memory_space<vmem>>, %arg3: memref<1x256xf32, #tpu.memory_space<vmem>>, %arg4: memref<256x784xbf16, #tpu.memory_space<vmem>>, %arg5: memref<1x784xf32, #tpu.memory_space<vmem>>, %arg6: memref<8x784xbf16, #tpu.memory_space<vmem>>) attributes {dimension_semantics = [#tpu.dimension_semantics<parallel>], iteration_bounds = array<i64: 1>, scalar_prefetch = 0 : i64, scratch_operands = 0 : i64, tpu.core_type = #tpu.core_type<tc>, window_params = [{transform_indices = @transform_0, window_bounds = array<i64: 8, 64>}, {pipeline_mode = #tpu.pipeline_mode<synchronous>, transform_indices = @transform_1, window_bounds = array<i64: 64, 256>}, {pipeline_mode = #tpu.pipeline_mode<synchronous>, transform_indices = @transform_2, window_bounds = array<i64: 1, 256>}, {pipeline_mode = #tpu.pipeline_mode<synchronous>, transform_indices = @transform_3, window_bounds = array<i64: 256, 784>}, {pipeline_mode = #tpu.pipeline_mode<synchronous>, transform_indices = @transform_4, window_bounds = array<i64: 1, 784>}, {transform_indices = @transform_5, window_bounds = array<i64: 8, 784>}]} {
    %c0 = arith.constant 0 : index
    %c0_0 = arith.constant 0 : index
    %0 = vector.load %arg1[%c0, %c0_0] : memref<8x64xf32, #tpu.memory_space<vmem>>, vector<8x64xf32>
    %1 = arith.truncf %0 : vector<8x64xf32> to vector<8x64xbf16>
    %c0_1 = arith.constant 0 : index
    %c0_2 = arith.constant 0 : index
    %2 = vector.load %arg2[%c0_1, %c0_2] : memref<64x256xbf16, #tpu.memory_space<vmem>>, vector<64x256xbf16>
    %cst = arith.constant dense<0.000000e+00> : vector<8x256xf32>
    %3 = tpu.matmul %1, %2, %cst {dimension_numbers = #tpu.dot_dimension_numbers<[1], [0], [0], [1], [0, 0, 1, 1], [], []>} : vector<8x64xbf16>, vector<64x256xbf16>, vector<8x256xf32> -> vector<8x256xf32>
    %c0_3 = arith.constant 0 : index
    %c0_4 = arith.constant 0 : index
    %4 = vector.load %arg3[%c0_3, %c0_4] : memref<1x256xf32, #tpu.memory_space<vmem>>, vector<1x256xf32>
    %5 = vector.broadcast %4 : vector<1x256xf32> to vector<8x256xf32>
    %6 = arith.addf %3, %5 : vector<8x256xf32>
    %cst_5 = arith.constant 1.000000e-01 : f32
    %7 = vector.broadcast %cst_5 : f32 to vector<8x256xf32>
    %8 = arith.mulf %7, %6 : vector<8x256xf32>
    %9 = arith.maximumf %6, %8 : vector<8x256xf32>
    %10 = arith.truncf %9 : vector<8x256xf32> to vector<8x256xbf16>
    %c0_6 = arith.constant 0 : index
    %c0_7 = arith.constant 0 : index
    %11 = vector.load %arg4[%c0_6, %c0_7] : memref<256x784xbf16, #tpu.memory_space<vmem>>, vector<256x784xbf16>
    %cst_8 = arith.constant dense<0.000000e+00> : vector<8x784xf32>
    %12 = tpu.matmul %10, %11, %cst_8 {dimension_numbers = #tpu.dot_dimension_numbers<[1], [0], [0], [1], [0, 0, 1, 1], [], []>} : vector<8x256xbf16>, vector<256x784xbf16>, vector<8x784xf32> -> vector<8x784xf32>
    %c0_9 = arith.constant 0 : index
    %c0_10 = arith.constant 0 : index
    %13 = vector.load %arg5[%c0_9, %c0_10] : memref<1x784xf32, #tpu.memory_space<vmem>>, vector<1x784xf32>
    %14 = vector.broadcast %13 : vector<1x784xf32> to vector<8x784xf32>
    %15 = arith.addf %12, %14 : vector<8x784xf32>
    %16 = arith.truncf %15 : vector<8x784xf32> to vector<8x784xbf16>
    %17 = math.tanh %16 : vector<8x784xbf16>
    %c0_11 = arith.constant 0 : index
    %c0_12 = arith.constant 0 : index
    %18 = vector.load %arg6[%c0_11, %c0_12] : memref<8x784xbf16, #tpu.memory_space<vmem>>, vector<8x784xbf16>
    tpu.vector_store %arg6[%c0_11, %c0_12], %17 {strides = array<i32>} : memref<8x784xbf16, #tpu.memory_space<vmem>>, vector<8x784xbf16>,
    return
  }
  func.func @transform_0(%arg0: i32) -> (i32, i32) {
    %c0_i32 = arith.constant 0 : i32
    %c0_i32_0 = arith.constant 0 : i32
    return %arg0, %c0_i32 : i32, i32
  }
  func.func @transform_1(%arg0: i32) -> (i32, i32) {
    %c0_i32 = arith.constant 0 : i32
    %c0_i32_0 = arith.constant 0 : i32
    %c0_i32_1 = arith.constant 0 : i32
    return %c0_i32, %c0_i32_0 : i32, i32
  }
  func.func @transform_2(%arg0: i32) -> (i32, i32) {
    %c0_i32 = arith.constant 0 : i32
    %c0_i32_0 = arith.constant 0 : i32
    %c0_i32_1 = arith.constant 0 : i32
    return %c0_i32, %c0_i32_0 : i32, i32
  }
  func.func @transform_3(%arg0: i32) -> (i32, i32) {
    %c0_i32 = arith.constant 0 : i32
    %c0_i32_0 = arith.constant 0 : i32
    %c0_i32_1 = arith.constant 0 : i32
    return %c0_i32, %c0_i32_0 : i32, i32
  }
  func.func @transform_4(%arg0: i32) -> (i32, i32) {
    %c0_i32 = arith.constant 0 : i32
    %c0_i32_0 = arith.constant 0 : i32
    %c0_i32_1 = arith.constant 0 : i32
    return %c0_i32, %c0_i32_0 : i32, i32
  }
  func.func @transform_5(%arg0: i32) -> (i32, i32) {
    %c0_i32 = arith.constant 0 : i32
    %c0_i32_0 = arith.constant 0 : i32
    return %arg0, %c0_i32 : i32, i32
  }
}

</mosaic_0001>

<llo_original>
// kernel: generator_forward.1
$region0: #{generator_forward.1}
  #allocation0 [shape = 'u32[]', space=smem, size = 0x4, offset = 0x4, fixed_abs, tag = 'smem constant byte address 0x4 - core index']
  #allocation1 [shape = 'u32[144,128]{1,0:T(1,128)}', space=vmem, size = 0x12000, scoped, tag = 'internal scratch']
  %s0 = inlined_call_operand.vmem [shape: f32[8,64], index: 0, kind: input, shape index: {}]
  %s1 = inlined_call_operand.vmem [shape: bf16[64,256], index: 1, kind: input, shape index: {}]
  %s2 = inlined_call_operand.vmem [shape: f32[1,256], index: 2, kind: input, shape index: {}]
  %s3 = inlined_call_operand.vmem [shape: bf16[256,784], index: 3, kind: input, shape index: {}]
  %s4 = inlined_call_operand.vmem [shape: f32[1,784], index: 4, kind: input, shape index: {}]
  %s5 = inlined_call_operand.hbm [shape: bf16[8,784], index: 5, kind: output, shape index: {}]
  %s6 = sld [smem:[#allocation0]]
  $region30: #{generator_forward.1} parent=0
    _
  %s8 = ssub.s32 1, %s6
  %s9 = scalar_select 0, %s8, %s6
  $region1: #{generator_forward.1} parent=0
    #allocation2 [shape = 'u8[14336]{0}', space=vmem, size = 0x3800, scoped, tag = 'output window, operand 0, single buffered']
    #allocation3 [shape = 's32[1]{0}', space=sflag, size = 0x4, scoped, tag = 'scoped memory for generator_forward.1']
    %10 = vsyncpa [#allocation3], 0
    // Predicated region
    $region2: #{generator_forward.1} parent=1 // pred_check
      _
    $region3: #{generator_forward.1} parent=1 // pred_check_branch
      %12 = sbr.rel (0) target = $region5
    $region4: #{generator_forward.1} parent=1 // pred_region
      _
    $region5: #{generator_forward.1} parent=1 // pred_fallthru
      _
    // Predicated region
    $region6: #{generator_forward.1} parent=1 // pred_check
      _
    $region7: #{generator_forward.1} parent=1 // pred_check_branch
      %14 = sbr.rel (0) target = $region9
    $region8: #{generator_forward.1} parent=1 // pred_region
      _
    $region9: #{generator_forward.1} parent=1 // pred_fallthru
      _
    // Predicated region
    $region10: #{generator_forward.1} parent=1 // pred_check
      _
    $region11: #{generator_forward.1} parent=1 // pred_check_branch
      %16 = sbr.rel (0) target = $region13
    $region12: #{generator_forward.1} parent=1 // pred_region
      _
    $region13: #{generator_forward.1} parent=1 // pred_fallthru
      _
    // Predicated region
    $region14: #{generator_forward.1} parent=1 // pred_check
      _
    $region15: #{generator_forward.1} parent=1 // pred_check_branch
      %18 = sbr.rel (0) target = $region17
    $region16: #{generator_forward.1} parent=1 // pred_region
      _
    $region17: #{generator_forward.1} parent=1 // pred_fallthru
      _
    // Predicated region
    $region18: #{generator_forward.1} parent=1 // pred_check
      _
    $region19: #{generator_forward.1} parent=1 // pred_check_branch
      %20 = sbr.rel (0) target = $region21
    $region20: #{generator_forward.1} parent=1 // pred_region
      _
    $region21: #{generator_forward.1} parent=1 // pred_fallthru
      _
    %v22 = vld [vmem:[%s0] sm:$0xff]
    %v23 = vpack.c.bf16 %v22, %v22
    %v24 = vld [vmem:[%s1] sm:$0xff]
    %v25 = vld [vmem:[%s1 + $0x8] sm:$0xff]
    %v26 = vld [vmem:[%s1 + $0x10] sm:$0xff]
    %v27 = vld [vmem:[%s1 + $0x18] sm:$0xff]
    %v28 = vld [vmem:[%s1 + $0x20] sm:$0xff]
    %v29 = vld [vmem:[%s1 + $0x28] sm:$0xff]
    %v30 = vld [vmem:[%s1 + $0x30] sm:$0xff]
    %v31 = vld [vmem:[%s1 + $0x38] sm:$0xff]
    %v32 = vld [vmem:[%s2] sm:$0x3]
    %v34 = vlaneseq
    %v35 = vshrl.u32 %v34, 7
    %v36 = vsub.s32 0, %v35
    %v37 = vrot.slane %v32, %v36
    %v38 = vlaneseq
    %v39 = vshrl.u32 %v38, 7
    %v40 = vsub.s32 1, %v39
    %v41 = vrot.slane %v32, %v40
    %v52 = vunpack.c.l.b16 %v24
    %v53 = vunpack.c.h.b16 %v24
    %v54 = vunpack.c.l.b16 %v25
    %v55 = vunpack.c.h.b16 %v25
    %v56 = vunpack.c.l.b16 %v26
    %v57 = vunpack.c.h.b16 %v26
    %v58 = vunpack.c.l.b16 %v27
    %v59 = vunpack.c.h.b16 %v27
    %v60 = vunpack.c.l.b16 %v28
    %v61 = vunpack.c.h.b16 %v28
    %v62 = vunpack.c.l.b16 %v29
    %v63 = vunpack.c.h.b16 %v29
    %v64 = vunpack.c.l.b16 %v30
    %v65 = vunpack.c.h.b16 %v30
    %v66 = vunpack.c.l.b16 %v31
    %v67 = vunpack.c.h.b16 %v31
    %v68 = vpack.c.b16 %v54, %v52
    %v69 = vpack.c.b16 %v55, %v53
    %v70 = vpack.c.b16 %v58, %v56
    %v71 = vpack.c.b16 %v59, %v57
    %v72 = vpack.c.b16 %v62, %v60
    %v73 = vpack.c.b16 %v63, %v61
    %v74 = vpack.c.b16 %v66, %v64
    %v75 = vpack.c.b16 %v67, %v65
    %vm84 = vcmask 523264
    %v86 = vsel %vm84, %v23, 0
    %88 = vmatprep.subr.bf16.mxu0 %v69
    %89 = vmatpush1.bf16.msra.mxu0 %v68
    %90 = vmatprep.subr.bf16.mxu0 %v71
    %91 = vmatpush1.bf16.msra.mxu0 %v70
    %92 = vmatprep.subr.bf16.mxu0 %v73
    %93 = vmatpush1.bf16.msra.mxu0 %v72
    %94 = vmatprep.subr.bf16.mxu0 %v75
    %95 = vmatpush1.bf16.msra.mxu0 %v74
    %96 = vmatprep.subr.bf16.mxu0 0
    %97 = vmatpush1.bf16.msra.mxu0 0
    %98 = vmatprep.subr.bf16.mxu0 0
    %99 = vmatpush1.bf16.msra.mxu0 0
    %100 = vmatprep.subr.bf16.mxu0 0
    %101 = vmatpush1.bf16.msra.mxu0 0
    %102 = vmatprep.subr.bf16.mxu0 0
    %103 = vmatpush1.bf16.msra.mxu0 0
    %104 = vmatprep.subr.bf16.mxu0 0
    %105 = vmatpush1.bf16.msra.mxu0 0
    %106 = vmatprep.subr.bf16.mxu0 0
    %107 = vmatpush1.bf16.msra.mxu0 0
    %108 = vmatprep.subr.bf16.mxu0 0
    %109 = vmatpush1.bf16.msra.mxu0 0
    %110 = vmatprep.subr.bf16.mxu0 0
    %111 = vmatpush1.bf16.msra.mxu0 0
    %112 = vmatprep.subr.bf16.mxu0 0
    %113 = vmatpush1.bf16.msra.mxu0 0
    %114 = vmatprep.subr.bf16.mxu0 0
    %115 = vmatpush1.bf16.msra.mxu0 0
    %116 = vmatprep.subr.bf16.mxu0 0
    %117 = vmatpush1.bf16.msra.mxu0 0
    %118 = vmatprep.subr.bf16.mxu0 0
    %119 = vmatpush1.bf16.msra.mxu0 0
    %120 = vmatprep.mubr.bf16.mxu0 0
    %121 = vmatmul.mubr.bf16.gmra.mrb[0].mxu0 %v86
    %v122 = vpop.f32.mrb[0].mxu0
    %v123 = vadd.f32 %v37, %v122
    %v124 = vpop.f32.mrb[0].mxu0
    %v125 = vadd.f32 %v41, %v124
    %v126 = vpop.f32.mrb[0].mxu0
    %v127 = vpop.f32.mrb[0].mxu0
    %128 = vdwg.mxu0
    %v129 = vmul.f32 %v123, 0.1
    %v130 = vmul.f32 %v125, 0.1
    %v131 = vmax.f32 %v123, %v129
    %v132 = vmax.f32 %v125, %v130
    %v133 = vpack.c.bf16 %v131, %v131
    %v134 = vpack.c.bf16 %v132, %v132
    %v135 = vld [vmem:[%s3] sm:$0xff]
    %v136 = vld [vmem:[%s3 + $0x8] sm:$0xff]
    %v137 = vld [vmem:[%s3 + $0x10] sm:$0xff]
    %v138 = vld [vmem:[%s3 + $0x18] sm:$0xf]
    %v139 = vld [vmem:[%s3 + $0x1c] sm:$0xff]
    %v140 = vld [vmem:[%s3 + $0x24] sm:$0xff]
    %v141 = vld [vmem:[%s3 + $0x2c] sm:$0xff]
    %v142 = vld [vmem:[%s3 + $0x34] sm:$0xf]
    %v143 = vld [vmem:[%s3 + $0x38] sm:$0xff]
    %v144 = vld [vmem:[%s3 + $0x40] sm:$0xff]
    %v145 = vld [vmem:[%s3 + $0x48] sm:$0xff]
    %v146 = vld [vmem:[%s3 + $0x50] sm:$0xf]
    %v147 = vld [vmem:[%s3 + $0x54] sm:$0xff]
    %v148 = vld [vmem:[%s3 + $0x5c] sm:$0xff]
    %v149 = vld [vmem:[%s3 + $0x64] sm:$0xff]
    %v150 = vld [vmem:[%s3 + $0x6c] sm:$0xf]
    %v151 = vld [vmem:[%s3 + $0x70] sm:$0xff]
    %v152 = vld [vmem:[%s3 + $0x78] sm:$0xff]
    %v153 = vld [vmem:[%s3 + $0x80] sm:$0xff]
    %v154 = vld [vmem:[%s3 + $0x88] sm:$0xf]
    %v155 = vld [vmem:[%s3 + $0x8c] sm:$0xff]
    %v156 = vld [vmem:[%s3 + $0x94] sm:$0xff]
    %v157 = vld [vmem:[%s3 + $0x9c] sm:$0xff]
    %v158 = vld [vmem:[%s3 + $0xa4] sm:$0xf]
    %v159 = vld [vmem:[%s3 + $0xa8] sm:$0xff]
    %v160 = vld [vmem:[%s3 + $0xb0] sm:$0xff]
    %v161 = vld [vmem:[%s3 + $0xb8] sm:$0xff]
    %v162 = vld [vmem:[%s3 + $0xc0] sm:$0xf]
    %v163 = vld [vmem:[%s3 + $0xc4] sm:$0xff]
    %v164 = vld [vmem:[%s3 + $0xcc] sm:$0xff]
    %v165 = vld [vmem:[%s3 + $0xd4] sm:$0xff]
    %v166 = vld [vmem:[%s3 + $0xdc] sm:$0xf]
    %v167 = vld [vmem:[%s3 + $0xe0] sm:$0xff]
    %v168 = vld [vmem:[%s3 + $0xe8] sm:$0xff]
    %v169 = vld [vmem:[%s3 + $0xf0] sm:$0xff]
    %v170 = vld [vmem:[%s3 + $0xf8] sm:$0xf]
    %v171 = vld [vmem:[%s3 + $0xfc] sm:$0xff]
    %v172 = vld [vmem:[%s3 + $0x104] sm:$0xff]
    %v173 = vld [vmem:[%s3 + $0x10c] sm:$0xff]
    %v174 = vld [vmem:[%s3 + $0x114] sm:$0xf]
    %v175 = vld [vmem:[%s3 + $0x118] sm:$0xff]
    %v176 = vld [vmem:[%s3 + $0x120] sm:$0xff]
    %v177 = vld [vmem:[%s3 + $0x128] sm:$0xff]
    %v178 = vld [vmem:[%s3 + $0x130] sm:$0xf]
    %v179 = vld [vmem:[%s3 + $0x134] sm:$0xff]
    %v180 = vld [vmem:[%s3 + $0x13c] sm:$0xff]
    %v181 = vld [vmem:[%s3 + $0x144] sm:$0xff]
    %v182 = vld [vmem:[%s3 + $0x14c] sm:$0xf]
    %v183 = vld [vmem:[%s3 + $0x150] sm:$0xff]
    %v184 = vld [vmem:[%s3 + $0x158] sm:$0xff]
    %v185 = vld [vmem:[%s3 + $0x160] sm:$0xff]
    %v186 = vld [vmem:[%s3 + $0x168] sm:$0xf]
    %v187 = vld [vmem:[%s3 + $0x16c] sm:$0xff]
    %v188 = vld [vmem:[%s3 + $0x174] sm:$0xff]
    %v189 = vld [vmem:[%s3 + $0x17c] sm:$0xff]
    %v190 = vld [vmem:[%s3 + $0x184] sm:$0xf]
    %v191 = vld [vmem:[%s3 + $0x188] sm:$0xff]
    %v192 = vld [vmem:[%s3 + $0x190] sm:$0xff]
    %v193 = vld [vmem:[%s3 + $0x198] sm:$0xff]
    %v194 = vld [vmem:[%s3 + $0x1a0] sm:$0xf]
    %v195 = vld [vmem:[%s3 + $0x1a4] sm:$0xff]
    %v196 = vld [vmem:[%s3 + $0x1ac] sm:$0xff]
    %v197 = vld [vmem:[%s3 + $0x1b4] sm:$0xff]
    %v198 = vld [vmem:[%s3 + $0x1bc] sm:$0xf]
    %v199 = vld [vmem:[%s3 + $0x1c0] sm:$0xff]
    %v200 = vld [vmem:[%s3 + $0x1c8] sm:$0xff]
    %v201 = vld [vmem:[%s3 + $0x1d0] sm:$0xff]
    %v202 = vld [vmem:[%s3 + $0x1d8] sm:$0xf]
    %v203 = vld [vmem:[%s3 + $0x1dc] sm:$0xff]
    %v204 = vld [vmem:[%s3 + $0x1e4] sm:$0xff]
    %v205 = vld [vmem:[%s3 + $0x1ec] sm:$0xff]
    %v206 = vld [vmem:[%s3 + $0x1f4] sm:$0xf]
    %v207 = vld [vmem:[%s3 + $0x1f8] sm:$0xff]
    %v208 = vld [vmem:[%s3 + $0x200] sm:$0xff]
    %v209 = vld [vmem:[%s3 + $0x208] sm:$0xff]
    %v210 = vld [vmem:[%s3 + $0x210] sm:$0xf]
    %v211 = vld [vmem:[%s3 + $0x214] sm:$0xff]
    %v212 = vld [vmem:[%s3 + $0x21c] sm:$0xff]
    %v213 = vld [vmem:[%s3 + $0x224] sm:$0xff]
    %v214 = vld [vmem:[%s3 + $0x22c] sm:$0xf]
    %v215 = vld [vmem:[%s3 + $0x230] sm:$0xff]
    %v216 = vld [vmem:[%s3 + $0x238] sm:$0xff]
    %v217 = vld [vmem:[%s3 + $0x240] sm:$0xff]
    %v218 = vld [vmem:[%s3 + $0x248] sm:$0xf]
    %v219 = vld [vmem:[%s3 + $0x24c] sm:$0xff]
    %v220 = vld [vmem:[%s3 + $0x254] sm:$0xff]
    %v221 = vld [vmem:[%s3 + $0x25c] sm:$0xff]
    %v222 = vld [vmem:[%s3 + $0x264] sm:$0xf]
    %v223 = vld [vmem:[%s3 + $0x268] sm:$0xff]
    %v224 = vld [vmem:[%s3 + $0x270] sm:$0xff]
    %v225 = vld [vmem:[%s3 + $0x278] sm:$0xff]
    %v226 = vld [vmem:[%s3 + $0x280] sm:$0xf]
    %v227 = vld [vmem:[%s3 + $0x284] sm:$0xff]
    %v228 = vld [vmem:[%s3 + $0x28c] sm:$0xff]
    %v229 = vld [vmem:[%s3 + $0x294] sm:$0xff]
    %v230 = vld [vmem:[%s3 + $0x29c] sm:$0xf]
    %v231 = vld [vmem:[%s3 + $0x2a0] sm:$0xff]
    %v232 = vld [vmem:[%s3 + $0x2a8] sm:$0xff]
    %v233 = vld [vmem:[%s3 + $0x2b0] sm:$0xff]
    %v234 = vld [vmem:[%s3 + $0x2b8] sm:$0xf]
    %v235 = vld [vmem:[%s3 + $0x2bc] sm:$0xff]
    %v236 = vld [vmem:[%s3 + $0x2c4] sm:$0xff]
    %v237 = vld [vmem:[%s3 + $0x2cc] sm:$0xff]
    %v238 = vld [vmem:[%s3 + $0x2d4] sm:$0xf]
    %v239 = vld [vmem:[%s3 + $0x2d8] sm:$0xff]
    %v240 = vld [vmem:[%s3 + $0x2e0] sm:$0xff]
    %v241 = vld [vmem:[%s3 + $0x2e8] sm:$0xff]
    %v242 = vld [vmem:[%s3 + $0x2f0] sm:$0xf]
    %v243 = vld [vmem:[%s3 + $0x2f4] sm:$0xff]
    %v244 = vld [vmem:[%s3 + $0x2fc] sm:$0xff]
    %v245 = vld [vmem:[%s3 + $0x304] sm:$0xff]
    %v246 = vld [vmem:[%s3 + $0x30c] sm:$0xf]
    %v247 = vld [vmem:[%s3 + $0x310] sm:$0xff]
    %v248 = vld [vmem:[%s3 + $0x318] sm:$0xff]
    %v249 = vld [vmem:[%s3 + $0x320] sm:$0xff]
    %v250 = vld [vmem:[%s3 + $0x328] sm:$0xf]
    %v251 = vld [vmem:[%s3 + $0x32c] sm:$0xff]
    %v252 = vld [vmem:[%s3 + $0x334] sm:$0xff]
    %v253 = vld [vmem:[%s3 + $0x33c] sm:$0xff]
    %v254 = vld [vmem:[%s3 + $0x344] sm:$0xf]
    %v255 = vld [vmem:[%s3 + $0x348] sm:$0xff]
    %v256 = vld [vmem:[%s3 + $0x350] sm:$0xff]
    %v257 = vld [vmem:[%s3 + $0x358] sm:$0xff]
    %v258 = vld [vmem:[%s3 + $0x360] sm:$0xf]
    %v259 = vld [vmem:[%s3 + $0x364] sm:$0xff]
    %v260 = vld [vmem:[%s3 + $0x36c] sm:$0xff]
    %v261 = vld [vmem:[%s3 + $0x374] sm:$0xff]
    %v262 = vld [vmem:[%s3 + $0x37c] sm:$0xf]
    %v263 = vld [vmem:[%s4] sm:$0x7f]
    %v265 = vlaneseq
    %v266 = vshrl.u32 %v265, 7
    %v267 = vsub.s32 0, %v266
    %v268 = vrot.slane %v263, %v267
    %v269 = vlaneseq
    %v270 = vshrl.u32 %v269, 7
    %v271 = vsub.s32 1, %v270
    %v272 = vrot.slane %v263, %v271
    %v273 = vlaneseq
    %v274 = vshrl.u32 %v273, 7
    %v275 = vsub.s32 2, %v274
    %v276 = vrot.slane %v263, %v275
    %v277 = vlaneseq
    %v278 = vshrl.u32 %v277, 7
    %v279 = vsub.s32 3, %v278
    %v280 = vrot.slane %v263, %v279
    %v281 = vlaneseq
    %v282 = vshrl.u32 %v281, 7
    %v283 = vsub.s32 4, %v282
    %v284 = vrot.slane %v263, %v283
    %v285 = vlaneseq
    %v286 = vshrl.u32 %v285, 7
    %v287 = vsub.s32 5, %v286
    %v288 = vrot.slane %v263, %v287
    %v289 = vlaneseq
    %v290 = vshrl.u32 %v289, 7
    %v291 = vsub.s32 6, %v290
    %v292 = vrot.slane %v263, %v291
    %v428 = vunpack.c.l.b16 %v135
    %v429 = vunpack.c.h.b16 %v135
    %v430 = vunpack.c.l.b16 %v136
    %v431 = vunpack.c.h.b16 %v136
    %v432 = vunpack.c.l.b16 %v137
    %v433 = vunpack.c.h.b16 %v137
    %v434 = vunpack.c.l.b16 %v138
    %v435 = vunpack.c.l.b16 %v139
    %v436 = vunpack.c.h.b16 %v139
    %v437 = vunpack.c.l.b16 %v140
    %v438 = vunpack.c.h.b16 %v140
    %v439 = vunpack.c.l.b16 %v141
    %v440 = vunpack.c.h.b16 %v141
    %v441 = vunpack.c.l.b16 %v142
    %v442 = vunpack.c.l.b16 %v143
    %v443 = vunpack.c.h.b16 %v143
    %v444 = vunpack.c.l.b16 %v144
    %v445 = vunpack.c.h.b16 %v144
    %v446 = vunpack.c.l.b16 %v145
    %v447 = vunpack.c.h.b16 %v145
    %v448 = vunpack.c.l.b16 %v146
    %v449 = vunpack.c.l.b16 %v147
    %v450 = vunpack.c.h.b16 %v147
    %v451 = vunpack.c.l.b16 %v148
    %v452 = vunpack.c.h.b16 %v148
    %v453 = vunpack.c.l.b16 %v149
    %v454 = vunpack.c.h.b16 %v149
    %v455 = vunpack.c.l.b16 %v150
    %v456 = vunpack.c.l.b16 %v151
    %v457 = vunpack.c.h.b16 %v151
    %v458 = vunpack.c.l.b16 %v152
    %v459 = vunpack.c.h.b16 %v152
    %v460 = vunpack.c.l.b16 %v153
    %v461 = vunpack.c.h.b16 %v153
    %v462 = vunpack.c.l.b16 %v154
    %v463 = vunpack.c.l.b16 %v155
    %v464 = vunpack.c.h.b16 %v155
    %v465 = vunpack.c.l.b16 %v156
    %v466 = vunpack.c.h.b16 %v156
    %v467 = vunpack.c.l.b16 %v157
    %v468 = vunpack.c.h.b16 %v157
    %v469 = vunpack.c.l.b16 %v158
    %v470 = vunpack.c.l.b16 %v159
    %v471 = vunpack.c.h.b16 %v159
    %v472 = vunpack.c.l.b16 %v160
    %v473 = vunpack.c.h.b16 %v160
    %v474 = vunpack.c.l.b16 %v161
    %v475 = vunpack.c.h.b16 %v161
    %v476 = vunpack.c.l.b16 %v162
    %v477 = vunpack.c.l.b16 %v163
    %v478 = vunpack.c.h.b16 %v163
    %v479 = vunpack.c.l.b16 %v164
    %v480 = vunpack.c.h.b16 %v164
    %v481 = vunpack.c.l.b16 %v165
    %v482 = vunpack.c.h.b16 %v165
    %v483 = vunpack.c.l.b16 %v166
    %v484 = vunpack.c.l.b16 %v167
    %v485 = vunpack.c.h.b16 %v167
    %v486 = vunpack.c.l.b16 %v168
    %v487 = vunpack.c.h.b16 %v168
    %v488 = vunpack.c.l.b16 %v169
    %v489 = vunpack.c.h.b16 %v169
    %v490 = vunpack.c.l.b16 %v170
    %v491 = vunpack.c.l.b16 %v171
    %v492 = vunpack.c.h.b16 %v171
    %v493 = vunpack.c.l.b16 %v172
    %v494 = vunpack.c.h.b16 %v172
    %v495 = vunpack.c.l.b16 %v173
    %v496 = vunpack.c.h.b16 %v173
    %v497 = vunpack.c.l.b16 %v174
    %v498 = vunpack.c.l.b16 %v175
    %v499 = vunpack.c.h.b16 %v175
    %v500 = vunpack.c.l.b16 %v176
    %v501 = vunpack.c.h.b16 %v176
    %v502 = vunpack.c.l.b16 %v177
    %v503 = vunpack.c.h.b16 %v177
    %v504 = vunpack.c.l.b16 %v178
    %v505 = vunpack.c.l.b16 %v179
    %v506 = vunpack.c.h.b16 %v179
    %v507 = vunpack.c.l.b16 %v180
    %v508 = vunpack.c.h.b16 %v180
    %v509 = vunpack.c.l.b16 %v181
    %v510 = vunpack.c.h.b16 %v181
    %v511 = vunpack.c.l.b16 %v182
    %v512 = vunpack.c.l.b16 %v183
    %v513 = vunpack.c.h.b16 %v183
    %v514 = vunpack.c.l.b16 %v184
    %v515 = vunpack.c.h.b16 %v184
    %v516 = vunpack.c.l.b16 %v185
    %v517 = vunpack.c.h.b16 %v185
    %v518 = vunpack.c.l.b16 %v186
    %v519 = vunpack.c.l.b16 %v187
    %v520 = vunpack.c.h.b16 %v187
    %v521 = vunpack.c.l.b16 %v188
    %v522 = vunpack.c.h.b16 %v188
    %v523 = vunpack.c.l.b16 %v189
    %v524 = vunpack.c.h.b16 %v189
    %v525 = vunpack.c.l.b16 %v190
    %v526 = vunpack.c.l.b16 %v191
    %v527 = vunpack.c.h.b16 %v191
    %v528 = vunpack.c.l.b16 %v192
    %v529 = vunpack.c.h.b16 %v192
    %v530 = vunpack.c.l.b16 %v193
    %v531 = vunpack.c.h.b16 %v193
    %v532 = vunpack.c.l.b16 %v194
    %v533 = vunpack.c.l.b16 %v195
    %v534 = vunpack.c.h.b16 %v195
    %v535 = vunpack.c.l.b16 %v196
    %v536 = vunpack.c.h.b16 %v196
    %v537 = vunpack.c.l.b16 %v197
    %v538 = vunpack.c.h.b16 %v197
    %v539 = vunpack.c.l.b16 %v198
    %v540 = vunpack.c.l.b16 %v199
    %v541 = vunpack.c.h.b16 %v199
    %v542 = vunpack.c.l.b16 %v200
    %v543 = vunpack.c.h.b16 %v200
    %v544 = vunpack.c.l.b16 %v201
    %v545 = vunpack.c.h.b16 %v201
    %v546 = vunpack.c.l.b16 %v202
    %v547 = vunpack.c.l.b16 %v203
    %v548 = vunpack.c.h.b16 %v203
    %v549 = vunpack.c.l.b16 %v204
    %v550 = vunpack.c.h.b16 %v204
    %v551 = vunpack.c.l.b16 %v205
    %v552 = vunpack.c.h.b16 %v205
    %v553 = vunpack.c.l.b16 %v206
    %v554 = vunpack.c.l.b16 %v207
    %v555 = vunpack.c.h.b16 %v207
    %v556 = vunpack.c.l.b16 %v208
    %v557 = vunpack.c.h.b16 %v208
    %v558 = vunpack.c.l.b16 %v209
    %v559 = vunpack.c.h.b16 %v209
    %v560 = vunpack.c.l.b16 %v210
    %v561 = vunpack.c.l.b16 %v211
    %v562 = vunpack.c.h.b16 %v211
    %v563 = vunpack.c.l.b16 %v212
    %v564 = vunpack.c.h.b16 %v212
    %v565 = vunpack.c.l.b16 %v213
    %v566 = vunpack.c.h.b16 %v213
    %v567 = vunpack.c.l.b16 %v214
    %v568 = vunpack.c.l.b16 %v215
    %v569 = vunpack.c.h.b16 %v215
    %v570 = vunpack.c.l.b16 %v216
    %v571 = vunpack.c.h.b16 %v216
    %v572 = vunpack.c.l.b16 %v217
    %v573 = vunpack.c.h.b16 %v217
    %v574 = vunpack.c.l.b16 %v218
    %v575 = vunpack.c.l.b16 %v219
    %v576 = vunpack.c.h.b16 %v219
    %v577 = vunpack.c.l.b16 %v220
    %v578 = vunpack.c.h.b16 %v220
    %v579 = vunpack.c.l.b16 %v221
    %v580 = vunpack.c.h.b16 %v221
    %v581 = vunpack.c.l.b16 %v222
    %v582 = vunpack.c.l.b16 %v223
    %v583 = vunpack.c.h.b16 %v223
    %v584 = vunpack.c.l.b16 %v224
    %v585 = vunpack.c.h.b16 %v224
    %v586 = vunpack.c.l.b16 %v225
    %v587 = vunpack.c.h.b16 %v225
    %v588 = vunpack.c.l.b16 %v226
    %v589 = vunpack.c.l.b16 %v227
    %v590 = vunpack.c.h.b16 %v227
    %v591 = vunpack.c.l.b16 %v228
    %v592 = vunpack.c.h.b16 %v228
    %v593 = vunpack.c.l.b16 %v229
    %v594 = vunpack.c.h.b16 %v229
    %v595 = vunpack.c.l.b16 %v230
    %v596 = vunpack.c.l.b16 %v231
    %v597 = vunpack.c.h.b16 %v231
    %v598 = vunpack.c.l.b16 %v232
    %v599 = vunpack.c.h.b16 %v232
    %v600 = vunpack.c.l.b16 %v233
    %v601 = vunpack.c.h.b16 %v233
    %v602 = vunpack.c.l.b16 %v234
    %v603 = vunpack.c.l.b16 %v235
    %v604 = vunpack.c.h.b16 %v235
    %v605 = vunpack.c.l.b16 %v236
    %v606 = vunpack.c.h.b16 %v236
    %v607 = vunpack.c.l.b16 %v237
    %v608 = vunpack.c.h.b16 %v237
    %v609 = vunpack.c.l.b16 %v238
    %v610 = vunpack.c.l.b16 %v239
    %v611 = vunpack.c.h.b16 %v239
    %v612 = vunpack.c.l.b16 %v240
    %v613 = vunpack.c.h.b16 %v240
    %v614 = vunpack.c.l.b16 %v241
    %v615 = vunpack.c.h.b16 %v241
    %v616 = vunpack.c.l.b16 %v242
    %v617 = vunpack.c.l.b16 %v243
    %v618 = vunpack.c.h.b16 %v243
    %v619 = vunpack.c.l.b16 %v244
    %v620 = vunpack.c.h.b16 %v244
    %v621 = vunpack.c.l.b16 %v245
    %v622 = vunpack.c.h.b16 %v245
    %v623 = vunpack.c.l.b16 %v246
    %v624 = vunpack.c.l.b16 %v247
    %v625 = vunpack.c.h.b16 %v247
    %v626 = vunpack.c.l.b16 %v248
    %v627 = vunpack.c.h.b16 %v248
    %v628 = vunpack.c.l.b16 %v249
    %v629 = vunpack.c.h.b16 %v249
    %v630 = vunpack.c.l.b16 %v250
    %v631 = vunpack.c.l.b16 %v251
    %v632 = vunpack.c.h.b16 %v251
    %v633 = vunpack.c.l.b16 %v252
    %v634 = vunpack.c.h.b16 %v252
    %v635 = vunpack.c.l.b16 %v253
    %v636 = vunpack.c.h.b16 %v253
    %v637 = vunpack.c.l.b16 %v254
    %v638 = vunpack.c.l.b16 %v255
    %v639 = vunpack.c.h.b16 %v255
    %v640 = vunpack.c.l.b16 %v256
    %v641 = vunpack.c.h.b16 %v256
    %v642 = vunpack.c.l.b16 %v257
    %v643 = vunpack.c.h.b16 %v257
    %v644 = vunpack.c.l.b16 %v258
    %v645 = vunpack.c.l.b16 %v259
    %v646 = vunpack.c.h.b16 %v259
    %v647 = vunpack.c.l.b16 %v260
    %v648 = vunpack.c.h.b16 %v260
    %v649 = vunpack.c.l.b16 %v261
    %v650 = vunpack.c.h.b16 %v261
    %v651 = vunpack.c.l.b16 %v262
    %v652 = vpack.c.b16 %v435, %v428
    %v653 = vpack.c.b16 %v436, %v429
    %v654 = vpack.c.b16 %v437, %v430
    %v655 = vpack.c.b16 %v438, %v431
    %v656 = vpack.c.b16 %v439, %v432
    %v657 = vpack.c.b16 %v440, %v433
    %v658 = vpack.c.b16 %v441, %v434
    %v659 = vpack.c.b16 %v449, %v442
    %v660 = vpack.c.b16 %v450, %v443
    %v661 = vpack.c.b16 %v451, %v444
    %v662 = vpack.c.b16 %v452, %v445
    %v663 = vpack.c.b16 %v453, %v446
    %v664 = vpack.c.b16 %v454, %v447
    %v665 = vpack.c.b16 %v455, %v448
    %v666 = vpack.c.b16 %v463, %v456
    %v667 = vpack.c.b16 %v464, %v457
    %v668 = vpack.c.b16 %v465, %v458
    %v669 = vpack.c.b16 %v466, %v459
    %v670 = vpack.c.b16 %v467, %v460
    %v671 = vpack.c.b16 %v468, %v461
    %v672 = vpack.c.b16 %v469, %v462
    %v673 = vpack.c.b16 %v477, %v470
    %v674 = vpack.c.b16 %v478, %v471
    %v675 = vpack.c.b16 %v479, %v472
    %v676 = vpack.c.b16 %v480, %v473
    %v677 = vpack.c.b16 %v481, %v474
    %v678 = vpack.c.b16 %v482, %v475
    %v679 = vpack.c.b16 %v483, %v476
    %v680 = vpack.c.b16 %v491, %v484
    %v681 = vpack.c.b16 %v492, %v485
    %v682 = vpack.c.b16 %v493, %v486
    %v683 = vpack.c.b16 %v494, %v487
    %v684 = vpack.c.b16 %v495, %v488
    %v685 = vpack.c.b16 %v496, %v489
    %v686 = vpack.c.b16 %v497, %v490
    %v687 = vpack.c.b16 %v505, %v498
    %v688 = vpack.c.b16 %v506, %v499
    %v689 = vpack.c.b16 %v507, %v500
    %v690 = vpack.c.b16 %v508, %v501
    %v691 = vpack.c.b16 %v509, %v502
    %v692 = vpack.c.b16 %v510, %v503
    %v693 = vpack.c.b16 %v511, %v504
    %v694 = vpack.c.b16 %v519, %v512
    %v695 = vpack.c.b16 %v520, %v513
    %v696 = vpack.c.b16 %v521, %v514
    %v697 = vpack.c.b16 %v522, %v515
    %v698 = vpack.c.b16 %v523, %v516
    %v699 = vpack.c.b16 %v524, %v517
    %v700 = vpack.c.b16 %v525, %v518
    %v701 = vpack.c.b16 %v533, %v526
    %v702 = vpack.c.b16 %v534, %v527
    %v703 = vpack.c.b16 %v535, %v528
    %v704 = vpack.c.b16 %v536, %v529
    %v705 = vpack.c.b16 %v537, %v530
    %v706 = vpack.c.b16 %v538, %v531
    %v707 = vpack.c.b16 %v539, %v532
    %v708 = vpack.c.b16 %v547, %v540
    %v709 = vpack.c.b16 %v548, %v541
    %v710 = vpack.c.b16 %v549, %v542
    %v711 = vpack.c.b16 %v550, %v543
    %v712 = vpack.c.b16 %v551, %v544
    %v713 = vpack.c.b16 %v552, %v545
    %v714 = vpack.c.b16 %v553, %v546
    %v715 = vpack.c.b16 %v561, %v554
    %v716 = vpack.c.b16 %v562, %v555
    %v717 = vpack.c.b16 %v563, %v556
    %v718 = vpack.c.b16 %v564, %v557
    %v719 = vpack.c.b16 %v565, %v558
    %v720 = vpack.c.b16 %v566, %v559
    %v721 = vpack.c.b16 %v567, %v560
    %v722 = vpack.c.b16 %v575, %v568
    %v723 = vpack.c.b16 %v576, %v569
    %v724 = vpack.c.b16 %v577, %v570
    %v725 = vpack.c.b16 %v578, %v571
    %v726 = vpack.c.b16 %v579, %v572
    %v727 = vpack.c.b16 %v580, %v573
    %v728 = vpack.c.b16 %v581, %v574
    %v729 = vpack.c.b16 %v589, %v582
    %v730 = vpack.c.b16 %v590, %v583
    %v731 = vpack.c.b16 %v591, %v584
    %v732 = vpack.c.b16 %v592, %v585
    %v733 = vpack.c.b16 %v593, %v586
    %v734 = vpack.c.b16 %v594, %v587
    %v735 = vpack.c.b16 %v595, %v588
    %v736 = vpack.c.b16 %v603, %v596
    %v737 = vpack.c.b16 %v604, %v597
    %v738 = vpack.c.b16 %v605, %v598
    %v739 = vpack.c.b16 %v606, %v599
    %v740 = vpack.c.b16 %v607, %v600
    %v741 = vpack.c.b16 %v608, %v601
    %v742 = vpack.c.b16 %v609, %v602
    %v743 = vpack.c.b16 %v617, %v610
    %v744 = vpack.c.b16 %v618, %v611
    %v745 = vpack.c.b16 %v619, %v612
    %v746 = vpack.c.b16 %v620, %v613
    %v747 = vpack.c.b16 %v621, %v614
    %v748 = vpack.c.b16 %v622, %v615
    %v749 = vpack.c.b16 %v623, %v616
    %v750 = vpack.c.b16 %v631, %v624
    %v751 = vpack.c.b16 %v632, %v625
    %v752 = vpack.c.b16 %v633, %v626
    %v753 = vpack.c.b16 %v634, %v627
    %v754 = vpack.c.b16 %v635, %v628
    %v755 = vpack.c.b16 %v636, %v629
    %v756 = vpack.c.b16 %v637, %v630
    %v757 = vpack.c.b16 %v645, %v638
    %v758 = vpack.c.b16 %v646, %v639
    %v759 = vpack.c.b16 %v647, %v640
    %v760 = vpack.c.b16 %v648, %v641
    %v761 = vpack.c.b16 %v649, %v642
    %v762 = vpack.c.b16 %v650, %v643
    %v763 = vpack.c.b16 %v651, %v644
    %876 = vmatprep.subr.bf16.mxu0 %v653
    %877 = vmatpush1.bf16.msra.mxu0 %v652
    %878 = vmatprep.subr.bf16.mxu0 %v660
    %879 = vmatpush1.bf16.msra.mxu0 %v659
    %880 = vmatprep.subr.bf16.mxu0 %v667
    %881 = vmatpush1.bf16.msra.mxu0 %v666
    %882 = vmatprep.subr.bf16.mxu0 %v674
    %883 = vmatpush1.bf16.msra.mxu0 %v673
    %884 = vmatprep.subr.bf16.mxu0 %v681
    %885 = vmatpush1.bf16.msra.mxu0 %v680
    %886 = vmatprep.subr.bf16.mxu0 %v688
    %887 = vmatpush1.bf16.msra.mxu0 %v687
    %888 = vmatprep.subr.bf16.mxu0 %v695
    %889 = vmatpush1.bf16.msra.mxu0 %v694
    %890 = vmatprep.subr.bf16.mxu0 %v702
    %891 = vmatpush1.bf16.msra.mxu0 %v701
    %892 = vmatprep.subr.bf16.mxu0 %v709
    %893 = vmatpush1.bf16.msra.mxu0 %v708
    %894 = vmatprep.subr.bf16.mxu0 %v716
    %895 = vmatpush1.bf16.msra.mxu0 %v715
    %896 = vmatprep.subr.bf16.mxu0 %v723
    %897 = vmatpush1.bf16.msra.mxu0 %v722
    %898 = vmatprep.subr.bf16.mxu0 %v730
    %899 = vmatpush1.bf16.msra.mxu0 %v729
    %900 = vmatprep.subr.bf16.mxu0 %v737
    %901 = vmatpush1.bf16.msra.mxu0 %v736
    %902 = vmatprep.subr.bf16.mxu0 %v744
    %903 = vmatpush1.bf16.msra.mxu0 %v743
    %904 = vmatprep.subr.bf16.mxu0 %v751
    %905 = vmatpush1.bf16.msra.mxu0 %v750
    %906 = vmatprep.subr.bf16.mxu0 %v758
    %907 = vmatpush1.bf16.msra.mxu0 %v757
    %908 = vmatprep.mubr.bf16.mxu0 %v134
    %909 = vmatmul.mubr.bf16.gmra.mrb[0].mxu0 %v133
    %v910 = vpop.f32.mrb[0].mxu0
    %v911 = vadd.f32 %v268, %v910
    %v912 = vpop.f32.mrb[0].mxu0
    %v913 = vadd.f32 %v272, %v912
    %v914 = vpop.f32.mrb[0].mxu0
    %v915 = vpop.f32.mrb[0].mxu0
    %916 = vdwg.mxu0
    %917 = vmatprep.subr.bf16.mxu0 %v655
    %918 = vmatpush1.bf16.msra.mxu0 %v654
    %919 = vmatprep.subr.bf16.mxu0 %v662
    %920 = vmatpush1.bf16.msra.mxu0 %v661
    %921 = vmatprep.subr.bf16.mxu0 %v669
    %922 = vmatpush1.bf16.msra.mxu0 %v668
    %923 = vmatprep.subr.bf16.mxu0 %v676
    %924 = vmatpush1.bf16.msra.mxu0 %v675
    %925 = vmatprep.subr.bf16.mxu0 %v683
    %926 = vmatpush1.bf16.msra.mxu0 %v682
    %927 = vmatprep.subr.bf16.mxu0 %v690
    %928 = vmatpush1.bf16.msra.mxu0 %v689
    %929 = vmatprep.subr.bf16.mxu0 %v697
    %930 = vmatpush1.bf16.msra.mxu0 %v696
    %931 = vmatprep.subr.bf16.mxu0 %v704
    %932 = vmatpush1.bf16.msra.mxu0 %v703
    %933 = vmatprep.subr.bf16.mxu0 %v711
    %934 = vmatpush1.bf16.msra.mxu0 %v710
    %935 = vmatprep.subr.bf16.mxu0 %v718
    %936 = vmatpush1.bf16.msra.mxu0 %v717
    %937 = vmatprep.subr.bf16.mxu0 %v725
    %938 = vmatpush1.bf16.msra.mxu0 %v724
    %939 = vmatprep.subr.bf16.mxu0 %v732
    %940 = vmatpush1.bf16.msra.mxu0 %v731
    %941 = vmatprep.subr.bf16.mxu0 %v739
    %942 = vmatpush1.bf16.msra.mxu0 %v738
    %943 = vmatprep.subr.bf16.mxu0 %v746
    %944 = vmatpush1.bf16.msra.mxu0 %v745
    %945 = vmatprep.subr.bf16.mxu0 %v753
    %946 = vmatpush1.bf16.msra.mxu0 %v752
    %947 = vmatprep.subr.bf16.mxu0 %v760
    %948 = vmatpush1.bf16.msra.mxu0 %v759
    %949 = vmatprep.mubr.bf16.mxu0 %v134
    %950 = vmatmul.mubr.bf16.gmra.mrb[0].mxu0 %v133
    %v951 = vpop.f32.mrb[0].mxu0
    %v952 = vadd.f32 %v276, %v951
    %v953 = vpop.f32.mrb[0].mxu0
    %v954 = vadd.f32 %v280, %v953
    %v955 = vpop.f32.mrb[0].mxu0
    %v956 = vpop.f32.mrb[0].mxu0
    %957 = vdwg.mxu0
    %958 = vmatprep.subr.bf16.mxu0 %v657
    %959 = vmatpush1.bf16.msra.mxu0 %v656
    %960 = vmatprep.subr.bf16.mxu0 %v664
    %961 = vmatpush1.bf16.msra.mxu0 %v663
    %962 = vmatprep.subr.bf16.mxu0 %v671
    %963 = vmatpush1.bf16.msra.mxu0 %v670
    %964 = vmatprep.subr.bf16.mxu0 %v678
    %965 = vmatpush1.bf16.msra.mxu0 %v677
    %966 = vmatprep.subr.bf16.mxu0 %v685
    %967 = vmatpush1.bf16.msra.mxu0 %v684
    %968 = vmatprep.subr.bf16.mxu0 %v692
    %969 = vmatpush1.bf16.msra.mxu0 %v691
    %970 = vmatprep.subr.bf16.mxu0 %v699
    %971 = vmatpush1.bf16.msra.mxu0 %v698
    %972 = vmatprep.subr.bf16.mxu0 %v706
    %973 = vmatpush1.bf16.msra.mxu0 %v705
    %974 = vmatprep.subr.bf16.mxu0 %v713
    %975 = vmatpush1.bf16.msra.mxu0 %v712
    %976 = vmatprep.subr.bf16.mxu0 %v720
    %977 = vmatpush1.bf16.msra.mxu0 %v719
    %978 = vmatprep.subr.bf16.mxu0 %v727
    %979 = vmatpush1.bf16.msra.mxu0 %v726
    %980 = vmatprep.subr.bf16.mxu0 %v734
    %981 = vmatpush1.bf16.msra.mxu0 %v733
    %982 = vmatprep.subr.bf16.mxu0 %v741
    %983 = vmatpush1.bf16.msra.mxu0 %v740
    %984 = vmatprep.subr.bf16.mxu0 %v748
    %985 = vmatpush1.bf16.msra.mxu0 %v747
    %986 = vmatprep.subr.bf16.mxu0 %v755
    %987 = vmatpush1.bf16.msra.mxu0 %v754
    %988 = vmatprep.subr.bf16.mxu0 %v762
    %989 = vmatpush1.bf16.msra.mxu0 %v761
    %990 = vmatprep.mubr.bf16.mxu0 %v134
    %991 = vmatmul.mubr.bf16.gmra.mrb[0].mxu0 %v133
    %v992 = vpop.f32.mrb[0].mxu0
    %v993 = vadd.f32 %v284, %v992
    %v994 = vpop.f32.mrb[0].mxu0
    %v995 = vadd.f32 %v288, %v994
    %v996 = vpop.f32.mrb[0].mxu0
    %v997 = vpop.f32.mrb[0].mxu0
    %998 = vdwg.mxu0
    %999 = vmatprep.subr.bf16.mxu0 0
    %1000 = vmatpush1.bf16.msra.mxu0 %v658
    %1001 = vmatprep.subr.bf16.mxu0 0
    %1002 = vmatpush1.bf16.msra.mxu0 %v665
    %1003 = vmatprep.subr.bf16.mxu0 0
    %1004 = vmatpush1.bf16.msra.mxu0 %v672
    %1005 = vmatprep.subr.bf16.mxu0 0
    %1006 = vmatpush1.bf16.msra.mxu0 %v679
    %1007 = vmatprep.subr.bf16.mxu0 0
    %1008 = vmatpush1.bf16.msra.mxu0 %v686
    %1009 = vmatprep.subr.bf16.mxu0 0
    %1010 = vmatpush1.bf16.msra.mxu0 %v693
    %1011 = vmatprep.subr.bf16.mxu0 0
    %1012 = vmatpush1.bf16.msra.mxu0 %v700
    %1013 = vmatprep.subr.bf16.mxu0 0
    %1014 = vmatpush1.bf16.msra.mxu0 %v707
    %1015 = vmatprep.subr.bf16.mxu0 0
    %1016 = vmatpush1.bf16.msra.mxu0 %v714
    %1017 = vmatprep.subr.bf16.mxu0 0
    %1018 = vmatpush1.bf16.msra.mxu0 %v721
    %1019 = vmatprep.subr.bf16.mxu0 0
    %1020 = vmatpush1.bf16.msra.mxu0 %v728
    %1021 = vmatprep.subr.bf16.mxu0 0
    %1022 = vmatpush1.bf16.msra.mxu0 %v735
    %1023 = vmatprep.subr.bf16.mxu0 0
    %1024 = vmatpush1.bf16.msra.mxu0 %v742
    %1025 = vmatprep.subr.bf16.mxu0 0
    %1026 = vmatpush1.bf16.msra.mxu0 %v749
    %1027 = vmatprep.subr.bf16.mxu0 0
    %1028 = vmatpush1.bf16.msra.mxu0 %v756
    %1029 = vmatprep.subr.bf16.mxu0 0
    %1030 = vmatpush1.bf16.msra.mxu0 %v763
    %1031 = vmatprep.mubr.bf16.mxu0 %v134
    %1032 = vmatmul.mubr.bf16.gmra.mrb[0].mxu0 %v133
    %v1033 = vpop.f32.mrb[0].mxu0
    %v1034 = vadd.f32 %v292, %v1033
    %v1035 = vpop.f32.mrb[0].mxu0
    %v1036 = vpop.f32.mrb[0].mxu0
    %v1037 = vpop.f32.mrb[0].mxu0
    %1038 = vdwg.mxu0
    %v1039 = vpack.c.bf16 %v911, %v911
    %v1040 = vpack.c.bf16 %v913, %v913
    %v1041 = vpack.c.bf16 %v952, %v952
    %v1042 = vpack.c.bf16 %v954, %v954
    %v1043 = vpack.c.bf16 %v993, %v993
    %v1044 = vpack.c.bf16 %v995, %v995
    %v1045 = vpack.c.bf16 %v1034, %v1034
    %v1046 = vtanh.bf16.pop %v1039
    %v1047 = vtanh.bf16.pop %v1040
    %v1048 = vtanh.bf16.pop %v1041
    %v1049 = vtanh.bf16.pop %v1042
    %v1050 = vtanh.bf16.pop %v1043
    %v1051 = vtanh.bf16.pop %v1044
    %v1052 = vtanh.bf16.pop %v1045
    %v1060 = vunpack.c.l.b16 %v1046
    %v1061 = vunpack.c.l.b16 %v1047
    %v1062 = vunpack.c.l.b16 %v1048
    %v1063 = vunpack.c.l.b16 %v1049
    %v1064 = vunpack.c.l.b16 %v1050
    %v1065 = vunpack.c.l.b16 %v1051
    %v1066 = vunpack.c.l.b16 %v1052
    %v1067 = vpack.c.b16 %v1061, %v1060
    %v1068 = vpack.c.b16 %v1063, %v1062
    %v1069 = vpack.c.b16 %v1065, %v1064
    %v1070 = vpack.c.b16 %v1066, %v1066
    %1075 = vst [vmem:[#allocation2] sm:$0xff] %v1067
    %1076 = vst [vmem:[#allocation2 + $0x8] sm:$0xff] %v1068
    %1077 = vst [vmem:[#allocation2 + $0x10] sm:$0xff] %v1069
    %vm1078 = vcmask 125952
    %1079 = vst.msk [vmem:[#allocation2 + $0x18] sm:$0xf] %vm1078, %v1070
    // Predicated region
    $region22: #{generator_forward.1} parent=1 // pred_check
      _
    $region23: #{generator_forward.1} parent=1 // pred_check_branch
      %1081 = sbr.rel (0) target = $region25
    $region24: #{generator_forward.1} parent=1 // pred_region
      %s1083 = ssub.s32 448, 448
      %1084 = vsyncadd [#allocation3], %s1083
      %s1086 = sshll.u32 [#allocation2], 4
      %s1087 = int_to_ptr.vmem [resolvable:$true] %s1086
      %1089 = dma.vmem_to_hbm [thread:$0]  %s1087, 448, %s5, [#allocation3]
    $region25: #{generator_forward.1} parent=1 // pred_fallthru
      _
    // Predicated region
    $region26: #{generator_forward.1} parent=1 // pred_check
      _
    $region27: #{generator_forward.1} parent=1 // pred_check_branch
      %1091 = sbr.rel (0) target = $region29
    $region28: #{generator_forward.1} parent=1 // pred_region
      %1092 = dma.done [#allocation3], 448
    $region29: #{generator_forward.1} parent=1 // pred_fallthru
      _
    %1093 = vsyncpa [#allocation3], 1

</llo_original>
